<compile_context>
chip_gen: v7x
topology: tpu7x:2x2x1
jax: 0.10.0
libtpu: 0.0.40
codegen_flags: <defaults>
</compile_context>

<pallas_src>
import functools

import jax
import jax.numpy as jnp
from jax import lax
from jax.experimental import pallas as pl
from jax.experimental.pallas import tpu as pltpu

EPS = 1e-5
EXPANSION = 4
DTYPE = jnp.bfloat16                 # activation / weight dtype on the MXU
VMEM_LIMIT = 48 * 1024 * 1024        # scoped VMEM limit (fits v7x's 64 MiB)
TILE_BUDGET = 8 * 1024 * 1024        # double-buffered row-tile budget per call


# ---------------------------------------------------------------------------
# Pallas kernels
# ---------------------------------------------------------------------------
def _matmul_kernel(*refs, relu, has_res):
    """o = maybe_relu(x @ w_folded + bias [+ residual]); f32 accumulate."""
    if has_res:
        x_ref, w_ref, b_ref, r_ref, o_ref = refs
    else:
        x_ref, w_ref, b_ref, o_ref = refs
        r_ref = None
    acc = jnp.dot(x_ref[...], w_ref[...], preferred_element_type=jnp.float32)
    out = acc + b_ref[...]
    if r_ref is not None:
        out = out + r_ref[...].astype(jnp.float32)
    if relu:
        out = jnp.maximum(out, 0.0)
    o_ref[...] = out.astype(o_ref.dtype)


def _conv3x3_kernel(x_ref, w_ref, b_ref, o_ref, *, H, W, stride):
    """3x3 conv (pad already applied) + BN bias + ReLU + optional s*s avgpool.

    x_ref: (1, H+2, W+2, C) padded activations of one batch element (bf16)
    w_ref: (9, C, Cout) per-tap weights with BN scale folded in (bf16)
    b_ref: (1, Cout) folded BN bias (f32)
    o_ref: (1, H/stride, W/stride, Cout)
    """
    C = w_ref.shape[1]
    Cout = w_ref.shape[2]
    acc = jnp.zeros((H * W, Cout), jnp.float32)
    for t in range(9):                                   # static tap loop
        dy, dx = divmod(t, 3)
        patch = x_ref[0, dy:dy + H, dx:dx + W, :].reshape(H * W, C)
        acc = acc + jnp.dot(patch, w_ref[t],
                            preferred_element_type=jnp.float32)
    out = jnp.maximum(acc + b_ref[...], 0.0)             # BN bias + ReLU (f32)
    if stride > 1:                                       # fused AvgPool2d
        s = stride
        Ho, Wo = H // s, W // s
        out = out.reshape(Ho, s, W, Cout).sum(axis=1)    # pool rows
        out = out.reshape(Ho * Wo, s, Cout).sum(axis=1)  # pool cols
        out = out * (1.0 / (s * s))
        o_ref[0] = out.reshape(Ho, Wo, Cout).astype(o_ref.dtype)
    else:
        o_ref[0] = out.reshape(H, W, Cout).astype(o_ref.dtype)


def _pool_matmul_kernel(x_ref, w_ref, b_ref, o_ref, *, H, W, stride):
    """Downsample branch: AvgPool2d(stride) then 1x1 conv + BN (no ReLU)."""
    s = stride
    Ho, Wo = H // s, W // s
    Cin = w_ref.shape[0]
    Cout = w_ref.shape[1]
    x = x_ref[0].astype(jnp.float32)                     # (H, W, Cin)
    p = x.reshape(Ho, s, W, Cin).sum(axis=1)
    p = p.reshape(Ho * Wo, s, Cin).sum(axis=1) * (1.0 / (s * s))
    acc = jnp.dot(p.astype(w_ref.dtype), w_ref[...],
                  preferred_element_type=jnp.float32)
    out = acc + b_ref[...]
    o_ref[0] = out.reshape(Ho, Wo, Cout).astype(o_ref.dtype)


# ---------------------------------------------------------------------------
# Pallas wrappers
# ---------------------------------------------------------------------------
def _pick_tm(M, row_bytes, budget=TILE_BUDGET):
    """Largest row tile that (a) divides M, (b) fits a double-buffered VMEM
    budget, (c) leaves >= 2 grid steps where possible (two v7x TensorCores)."""
    fitting = [tm for tm in (1024, 512, 256, 128, 64, 32, 16, 8)
               if M % tm == 0 and 2 * tm * row_bytes <= budget]
    if not fitting:
        return M                      # tiny / odd M: single full-extent block
    for tm in fitting:                # descending; first with >= 2 steps
        if M // tm >= 2:
            return tm
    return fitting[-1]


def matmul_affine(x2d, w, bias, *, relu, residual=None, out_dtype=None):
    """1x1 conv as a row-tiled matmul; BN scale pre-folded into `w`."""
    M, K = x2d.shape
    Nc = w.shape[1]
    out_dtype = jnp.dtype(out_dtype or x2d.dtype)
    row_bytes = (K * x2d.dtype.itemsize + Nc * out_dtype.itemsize
                 + (Nc * residual.dtype.itemsize if residual is not None else 0))
    tm = _pick_tm(M, row_bytes)

    in_specs = [pl.BlockSpec((tm, K), lambda i: (i, 0)),
                pl.BlockSpec((K, Nc), lambda i: (0, 0)),
                pl.BlockSpec((1, Nc), lambda i: (0, 0))]
    args = [x2d, w, bias]
    if residual is not None:
        in_specs.append(pl.BlockSpec((tm, Nc), lambda i: (i, 0)))
        args.append(residual)

    bytes_accessed = int(M * K * x2d.dtype.itemsize
                         + K * Nc * w.dtype.itemsize
                         + M * Nc * out_dtype.itemsize
                         + (M * Nc * residual.dtype.itemsize
                            if residual is not None else 0))
    return pl.pallas_call(
        functools.partial(_matmul_kernel, relu=relu,
                          has_res=residual is not None),
        out_shape=jax.ShapeDtypeStruct((M, Nc), out_dtype),
        grid=(M // tm,),
        in_specs=in_specs,
        out_specs=pl.BlockSpec((tm, Nc), lambda i: (i, 0)),
        compiler_params=pltpu.CompilerParams(
            dimension_semantics=("parallel",),
            vmem_limit_bytes=VMEM_LIMIT),
        cost_estimate=pl.CostEstimate(flops=int(2 * M * K * Nc),
                                      transcendentals=0,
                                      bytes_accessed=bytes_accessed),
    )(*args)


def conv3x3_bn_relu_pool(xp_nhwc, w9, bias, stride):
    """xp_nhwc: (N, H+2, W+2, C) padded.  Returns (N, H/stride, W/stride, Co)."""
    N, Hp, Wp, C = xp_nhwc.shape
    H, W = Hp - 2, Wp - 2
    Cout = w9.shape[-1]
    Ho, Wo = H // stride, W // stride
    return pl.pallas_call(
        functools.partial(_conv3x3_kernel, H=H, W=W, stride=stride),
        out_shape=jax.ShapeDtypeStruct((N, Ho, Wo, Cout), xp_nhwc.dtype),
        grid=(N,),
        in_specs=[pl.BlockSpec((1, Hp, Wp, C), lambda n: (n, 0, 0, 0)),
                  pl.BlockSpec((9, C, Cout), lambda n: (0, 0, 0)),
                  pl.BlockSpec((1, Cout), lambda n: (0, 0))],
        out_specs=pl.BlockSpec((1, Ho, Wo, Cout), lambda n: (n, 0, 0, 0)),
        compiler_params=pltpu.CompilerParams(
            dimension_semantics=("parallel",),
            vmem_limit_bytes=VMEM_LIMIT),
    )(xp_nhwc, w9, bias)


def pool_conv1x1(x_nhwc, w, bias, stride):
    """Downsample branch: fused AvgPool2d(stride) + 1x1 conv + BN bias."""
    N, H, W, Cin = x_nhwc.shape
    Cout = w.shape[1]
    Ho, Wo = H // stride, W // stride
    return pl.pallas_call(
        functools.partial(_pool_matmul_kernel, H=H, W=W, stride=stride),
        out_shape=jax.ShapeDtypeStruct((N, Ho, Wo, Cout), x_nhwc.dtype),
        grid=(N,),
        in_specs=[pl.BlockSpec((1, H, W, Cin), lambda n: (n, 0, 0, 0)),
                  pl.BlockSpec((Cin, Cout), lambda n: (0, 0)),
                  pl.BlockSpec((1, Cout), lambda n: (0, 0))],
        out_specs=pl.BlockSpec((1, Ho, Wo, Cout), lambda n: (n, 0, 0, 0)),
        compiler_params=pltpu.CompilerParams(
            dimension_semantics=("parallel",),
            vmem_limit_bytes=VMEM_LIMIT),
    )(x_nhwc, w, bias)


# ---------------------------------------------------------------------------
# Parameters (deterministic, synthetic) and BN folding
# ---------------------------------------------------------------------------
def init_params(key, inplanes, planes):
    ks = jax.random.split(key, 8)

    def w(k, shape):
        return 0.1 * jax.random.normal(k, shape, jnp.float32)

    def bn(k, c):
        k1, k2, k3, k4 = jax.random.split(k, 4)
        return dict(
            gamma=1.0 + 0.1 * jax.random.normal(k1, (c,), jnp.float32),
            beta=0.1 * jax.random.normal(k2, (c,), jnp.float32),
            mean=0.1 * jax.random.normal(k3, (c,), jnp.float32),
            var=1.0 + 0.1 * jnp.abs(jax.random.normal(k4, (c,), jnp.float32)),
        )

    return dict(
        conv1_w=w(ks[0], (planes, inplanes, 1, 1)),
        bn1=bn(ks[1], planes),
        conv2_w=w(ks[2], (planes, planes, 3, 3)),
        bn2=bn(ks[3], planes),
        conv3_w=w(ks[4], (planes * EXPANSION, planes, 1, 1)),
        bn3=bn(ks[5], planes * EXPANSION),
        down_w=w(ks[6], (planes * EXPANSION, inplanes, 1, 1)),
        down_bn=bn(ks[7], planes * EXPANSION),
    )


def _fold_bn_into_w(w, bn):
    """Fold eval-mode BN into the conv weight columns; return (w bf16, bias f32).
    `w` has output channels on its last axis."""
    scale = bn["gamma"] / jnp.sqrt(bn["var"] + EPS)
    bias = bn["beta"] - bn["mean"] * scale
    return (w * scale).astype(DTYPE), bias[None, :].astype(jnp.float32)


# ---------------------------------------------------------------------------
# Bottleneck forward (NCHW in / NCHW out, like the PyTorch module)
# ---------------------------------------------------------------------------
def bottleneck_forward(x_nchw, params, inplanes, planes, stride):
    has_down = stride > 1 or inplanes != planes * EXPANSION
    N, _, H, W = x_nchw.shape
    x = jnp.transpose(x_nchw, (0, 2, 3, 1)).astype(DTYPE)      # NCHW -> NHWC

    w1, b1 = _fold_bn_into_w(params["conv1_w"][:, :, 0, 0].T, params["bn1"])
    w2 = params["conv2_w"].transpose(2, 3, 1, 0).reshape(9, planes, planes)
    w2, b2 = _fold_bn_into_w(w2, params["bn2"])
    w3, b3 = _fold_bn_into_w(params["conv3_w"][:, :, 0, 0].T, params["bn3"])

    # conv1 (1x1) + bn1 + relu -- row-tiled matmul
    M0 = N * H * W
    out = matmul_affine(x.reshape(M0, inplanes), w1, b1, relu=True)
    out = out.reshape(N, H, W, planes)

    # conv2 (3x3, pad=1) + bn2 + relu (+ fused avgpool when stride > 1):
    # pad once, then accumulate the 9 taps inside the kernel (no im2col).
    xp = jnp.pad(out, ((0, 0), (1, 1), (1, 1), (0, 0)))
    out = conv3x3_bn_relu_pool(xp, w2, b2, stride)
    Ho, Wo = H // stride, W // stride
    M1 = N * Ho * Wo

    # downsample / identity branch (computed first so it fuses into conv3)
    if has_down:
        wd, bd = _fold_bn_into_w(params["down_w"][:, :, 0, 0].T,
                                 params["down_bn"])
        if stride > 1:
            idn = pool_conv1x1(x, wd, bd, stride)
            idn = idn.reshape(M1, planes * EXPANSION)
        else:
            idn = matmul_affine(x.reshape(M1, inplanes), wd, bd, relu=False)
    else:
        idn = x.reshape(M1, planes * EXPANSION)

    # conv3 (1x1) + bn3 + fused residual add + relu
    out = matmul_affine(out.reshape(M1, planes), w3, b3, relu=True,
                        residual=idn, out_dtype=jnp.float32)
    out = out.reshape(N, Ho, Wo, planes * EXPANSION)
    return jnp.transpose(out, (0, 3, 1, 2))                    # NHWC -> NCHW


# ---------------------------------------------------------------------------
# Pure-JAX reference (mirrors the PyTorch forward with eval-mode BN, f32)
# ---------------------------------------------------------------------------
def reference_forward(x, p, inplanes, planes, stride):
    def conv(x, w, pad):
        return lax.conv_general_dilated(
            x, w, (1, 1), [(pad, pad), (pad, pad)],
            dimension_numbers=("NCHW", "OIHW", "NCHW"))

    def bn(x, q):
        sh = (1, -1, 1, 1)
        return ((x - q["mean"].reshape(sh)) / jnp.sqrt(q["var"].reshape(sh) + EPS)
                * q["gamma"].reshape(sh) + q["beta"].reshape(sh))

    def pool(x, s):
        N, C, H, W = x.shape
        return x.reshape(N, C, H // s, s, W // s, s).mean(axis=(3, 5))

    out = jax.nn.relu(bn(conv(x, p["conv1_w"], 0), p["bn1"]))
    out = jax.nn.relu(bn(conv(out, p["conv2_w"], 1), p["bn2"]))
    if stride > 1:
        out = pool(out, stride)
    out = bn(conv(out, p["conv3_w"], 0), p["bn3"])
    if stride > 1 or inplanes != planes * EXPANSION:
        idn = pool(x, stride) if stride > 1 else x
        idn = bn(conv(idn, p["down_w"], 0), p["down_bn"])
    else:
        idn = x
    return jax.nn.relu(out + idn)


if __name__ == "__main__":
    N, inplanes, planes, H, W, stride = 2, 16, 8, 16, 16, 2

    key = jax.random.PRNGKey(0)
    kx, kp = jax.random.split(key)
    x = jax.random.normal(kx, (N, inplanes, H, W), jnp.float32)
    params = init_params(kp, inplanes, planes)

    out = bottleneck_forward(x, params, inplanes, planes, stride)
    out = jax.block_until_ready(out)

    ref = reference_forward(x, params, inplanes, planes, stride)
    assert out.shape == (N, planes * EXPANSION, H // stride, W // stride), out.shape
    err = float(jnp.max(jnp.abs(out - ref)))
    # bf16 activations/weights with f32 accumulation: loosened tolerance.
    assert jnp.allclose(out, ref, atol=5e-2, rtol=5e-2), err

    print("KERNEL_OK")
</pallas_src>

<mosaic_0001>
module attributes {stable_mosaic.version = 11 : i64} {
  func.func @_matmul_kernel(%arg0: i32, %arg1: memref<256x16xbf16, #tpu.memory_space<vmem>>, %arg2: memref<16x8xbf16, #tpu.memory_space<vmem>>, %arg3: memref<1x8xf32, #tpu.memory_space<vmem>>, %arg4: memref<256x8xbf16, #tpu.memory_space<vmem>>) attributes {dimension_semantics = [#tpu.dimension_semantics<parallel>], iteration_bounds = array<i64: 2>, scalar_prefetch = 0 : i64, scratch_operands = 0 : i64, tpu.core_type = #tpu.core_type<tc>, window_params = [{transform_indices = @transform_0, window_bounds = array<i64: 256, 16>}, {pipeline_mode = #tpu.pipeline_mode<synchronous>, transform_indices = @transform_1, window_bounds = array<i64: 16, 8>}, {pipeline_mode = #tpu.pipeline_mode<synchronous>, transform_indices = @transform_2, window_bounds = array<i64: 1, 8>}, {transform_indices = @transform_3, window_bounds = array<i64: 256, 8>}]} {
    %c0 = arith.constant 0 : index
    %c0_0 = arith.constant 0 : index
    %0 = vector.load %arg1[%c0, %c0_0] : memref<256x16xbf16, #tpu.memory_space<vmem>>, vector<256x16xbf16>
    %c0_1 = arith.constant 0 : index
    %c0_2 = arith.constant 0 : index
    %1 = vector.load %arg2[%c0_1, %c0_2] : memref<16x8xbf16, #tpu.memory_space<vmem>>, vector<16x8xbf16>
    %cst = arith.constant dense<0.000000e+00> : vector<256x8xf32>
    %2 = tpu.matmul %0, %1, %cst {dimension_numbers = #tpu.dot_dimension_numbers<[1], [0], [0], [1], [0, 0, 1, 1], [], []>} : vector<256x16xbf16>, vector<16x8xbf16>, vector<256x8xf32> -> vector<256x8xf32>
    %c0_3 = arith.constant 0 : index
    %c0_4 = arith.constant 0 : index
    %3 = vector.load %arg3[%c0_3, %c0_4] : memref<1x8xf32, #tpu.memory_space<vmem>>, vector<1x8xf32>
    %4 = vector.broadcast %3 : vector<1x8xf32> to vector<256x8xf32>
    %5 = arith.addf %2, %4 : vector<256x8xf32>
    %cst_5 = arith.constant 0.000000e+00 : f32
    %6 = vector.broadcast %cst_5 : f32 to vector<256x8xf32>
    %7 = arith.maximumf %5, %6 : vector<256x8xf32>
    %8 = arith.truncf %7 : vector<256x8xf32> to vector<256x8xbf16>
    %c0_6 = arith.constant 0 : index
    %c0_7 = arith.constant 0 : index
    %9 = vector.load %arg4[%c0_6, %c0_7] : memref<256x8xbf16, #tpu.memory_space<vmem>>, vector<256x8xbf16>
    tpu.vector_store %arg4[%c0_6, %c0_7], %8 {strides = array<i32>} : memref<256x8xbf16, #tpu.memory_space<vmem>>, vector<256x8xbf16>,
    return
  }
  func.func @transform_0(%arg0: i32) -> (i32, i32) {
    %c0_i32 = arith.constant 0 : i32
    %c0_i32_0 = arith.constant 0 : i32
    return %arg0, %c0_i32 : i32, i32
  }
  func.func @transform_1(%arg0: i32) -> (i32, i32) {
    %c0_i32 = arith.constant 0 : i32
    %c0_i32_0 = arith.constant 0 : i32
    %c0_i32_1 = arith.constant 0 : i32
    return %c0_i32, %c0_i32_0 : i32, i32
  }
  func.func @transform_2(%arg0: i32) -> (i32, i32) {
    %c0_i32 = arith.constant 0 : i32
    %c0_i32_0 = arith.constant 0 : i32
    %c0_i32_1 = arith.constant 0 : i32
    return %c0_i32, %c0_i32_0 : i32, i32
  }
  func.func @transform_3(%arg0: i32) -> (i32, i32) {
    %c0_i32 = arith.constant 0 : i32
    %c0_i32_0 = arith.constant 0 : i32
    return %arg0, %c0_i32 : i32, i32
  }
}

</mosaic_0001>

<llo_original>
// kernel: tpu_custom_call.1
$region0: #{tpu_custom_call.1}
  #allocation0 [shape = 'u32[]', space=smem, size = 0x4, offset = 0x4, fixed_abs, tag = 'smem constant byte address 0x4 - core index']
  #allocation1 [shape = 'u32[144,128]{1,0:T(1,128)}', space=vmem, size = 0x12000, scoped, tag = 'internal scratch']
  %s0 = inlined_call_operand.vmem [shape: bf16[512,16], index: 0, kind: input, shape index: {}]
  %s1 = inlined_call_operand.vmem [shape: bf16[16,8], index: 1, kind: input, shape index: {}]
  %s2 = inlined_call_operand.vmem [shape: f32[1,8], index: 2, kind: input, shape index: {}]
  %s3 = inlined_call_operand.vmem [shape: bf16[512,8], index: 3, kind: output, shape index: {}]
  %s4 = sld [smem:[#allocation0]]
  $region45: #{tpu_custom_call.1} parent=0
    _
  %s6 = ssub.s32 1, %s4
  %s7 = scalar_select 0, %s6, %s4
  loop: start=0, step=1, limit=4
  $region2: #{tpu_custom_call.1} parent=0 // loop_pre_header
    _
  $region3: #{tpu_custom_call.1} parent=0 // loop_header
    %s9 = sphi 0, %s13
    %p10 = scmp.ge.s32.totalorder %s9, 4
    %s19 = sphi 0, %s21
    %s22 = sphi 0, %s19
    %s23 = sphi 0, %s22
    %s39 = sphi 0, %s23
    %s43 = sphi 0, %s43
    %s45 = sphi 0, %s43
    %s46 = sphi 0, %s45
    %s60 = sphi 0, %s46
    %s64 = sphi 0, %s64
    %s66 = sphi 0, %s64
    %s67 = sphi 0, %s66
    %s81 = sphi 0, %s67
    %s87 = sphi 0, %s89
    %s90 = sphi 0, %s87
    %s91 = sphi 0, %s90
    %s107 = sphi 0, %s91
  $region4: #{tpu_custom_call.1} parent=0 // loop_header_branch
    %12 = sbr.rel (%p10) target = $region8
  $region5: #{tpu_custom_call.1} parent=0 // loop_body
    %s14 = ssub.s32 %s9, 1
    %s15 = ssub.s32 %s9, 2
    %s16 = sadd.s32 %s9, 1
    %s17 = ssub.s32 %s9, %s16
    %p18 = scmp.eq.s32.totalorder %s17, 0
    %s20 = sadd.s32 %s19, 1
    %s21 = scalar_select %p18, %s19, %s20
    %p24 = pneg %p18
    %p25 = scmp.eq.s32.totalorder %s9, 1
    %p26 = por %p24, %p25
    %p27 = scmp.ne.s32.totalorder %s19, %s22
    %p28 = scmp.eq.s32.totalorder %s9, 0
    %p29 = por %p27, %p28
    %p30 = scmp.ne.s32.totalorder %s19, %s22
    %p31 = scmp.eq.s32.totalorder %s14, 1
    %p32 = por %p30, %p31
    %p33 = scmp.ne.s32.totalorder %s22, %s23
    %p34 = scmp.eq.s32.totalorder %s14, 0
    %p35 = por %p33, %p34
    %p36 = scmp.ne.s32.totalorder %s22, %s23
    %p37 = scmp.eq.s32.totalorder %s15, 1
    %p38 = por %p36, %p37
    %p40 = scmp.ne.s32.totalorder %s23, %s39
    %p41 = scmp.eq.s32.totalorder %s15, 0
    %p42 = por %p40, %p41
    %s44 = sadd.s32 %s43, 1
    %p47 = scmp.eq.s32.totalorder %s9, 1
    %p48 = scmp.ne.s32.totalorder %s43, %s45
    %p49 = scmp.eq.s32.totalorder %s9, 0
    %p50 = por %p48, %p49
    %p51 = scmp.ne.s32.totalorder %s43, %s45
    %p52 = scmp.eq.s32.totalorder %s14, 1
    %p53 = por %p51, %p52
    %p54 = scmp.ne.s32.totalorder %s45, %s46
    %p55 = scmp.eq.s32.totalorder %s14, 0
    %p56 = por %p54, %p55
    %p57 = scmp.ne.s32.totalorder %s45, %s46
    %p58 = scmp.eq.s32.totalorder %s15, 1
    %p59 = por %p57, %p58
    %p61 = scmp.ne.s32.totalorder %s46, %s60
    %p62 = scmp.eq.s32.totalorder %s15, 0
    %p63 = por %p61, %p62
    %s65 = sadd.s32 %s64, 1
    %p68 = scmp.eq.s32.totalorder %s9, 1
    %p69 = scmp.ne.s32.totalorder %s64, %s66
    %p70 = scmp.eq.s32.totalorder %s9, 0
    %p71 = por %p69, %p70
    %p72 = scmp.ne.s32.totalorder %s64, %s66
    %p73 = scmp.eq.s32.totalorder %s14, 1
    %p74 = por %p72, %p73
    %p75 = scmp.ne.s32.totalorder %s66, %s67
    %p76 = scmp.eq.s32.totalorder %s14, 0
    %p77 = por %p75, %p76
    %p78 = scmp.ne.s32.totalorder %s66, %s67
    %p79 = scmp.eq.s32.totalorder %s15, 1
    %p80 = por %p78, %p79
    %p82 = scmp.ne.s32.totalorder %s67, %s81
    %p83 = scmp.eq.s32.totalorder %s15, 0
    %p84 = por %p82, %p83
    %s85 = ssub.s32 %s9, %s16
    %p86 = scmp.eq.s32.totalorder %s85, 0
    %s88 = sadd.s32 %s87, 1
    %s89 = scalar_select %p86, %s87, %s88
    %p92 = pneg %p86
    %p93 = scmp.eq.s32.totalorder %s9, 1
    %p94 = por %p92, %p93
    %p95 = scmp.ne.s32.totalorder %s87, %s90
    %p96 = scmp.eq.s32.totalorder %s9, 0
    %p97 = por %p95, %p96
    %p98 = scmp.ne.s32.totalorder %s87, %s90
    %p99 = scmp.eq.s32.totalorder %s14, 1
    %p100 = por %p98, %p99
    %p101 = scmp.ne.s32.totalorder %s90, %s91
    %p102 = scmp.eq.s32.totalorder %s14, 0
    %p103 = por %p101, %p102
    %p104 = scmp.ne.s32.totalorder %s90, %s91
    %p105 = scmp.eq.s32.totalorder %s15, 1
    %p106 = por %p104, %p105
    %p108 = scmp.ne.s32.totalorder %s91, %s107
    %p109 = scmp.eq.s32.totalorder %s15, 0
    %p110 = por %p108, %p109
    %p111 = scmp.le.s32.totalorder 1, %s9
    %p112 = scmp.lt.s32.totalorder %s9, 3
    %p113 = pnand %p111, %p112
    %p114 = pneg %p113
    // Predicated region
    $region9: #{tpu_custom_call.1} parent=5 // pred_check
      _
    $region10: #{tpu_custom_call.1} parent=5 // pred_check_branch
      %116 = sbr.rel (%p113) target = $region12
    $region11: #{tpu_custom_call.1} parent=5 // pred_region
      %s117 = ssub.s32 %s9, 1
      // Predicated region
      $region13: #{tpu_custom_call.1} parent=11 // pred_check
        %p118 = pneg %p56
      $region14: #{tpu_custom_call.1} parent=11 // pred_check_branch
        %120 = sbr.rel (%p118) target = $region16
      $region15: #{tpu_custom_call.1} parent=11 // pred_region
        _
      $region16: #{tpu_custom_call.1} parent=11 // pred_fallthru
        _
      // Predicated region
      $region17: #{tpu_custom_call.1} parent=11 // pred_check
        %p121 = pneg %p77
      $region18: #{tpu_custom_call.1} parent=11 // pred_check_branch
        %123 = sbr.rel (%p121) target = $region20
      $region19: #{tpu_custom_call.1} parent=11 // pred_region
        _
      $region20: #{tpu_custom_call.1} parent=11 // pred_fallthru
        _
    $region12: #{tpu_custom_call.1} parent=5 // pred_fallthru
      _
    %p124 = scmp.lt.s32.totalorder %s9, 2
    // Predicated region
    $region21: #{tpu_custom_call.1} parent=5 // pred_check
      %p125 = pneg %p124
    $region22: #{tpu_custom_call.1} parent=5 // pred_check_branch
      %127 = sbr.rel (%p125) target = $region24
    $region23: #{tpu_custom_call.1} parent=5 // pred_region
      // Predicated region
      $region25: #{tpu_custom_call.1} parent=23 // pred_check
        %p128 = pneg %p29
      $region26: #{tpu_custom_call.1} parent=23 // pred_check_branch
        %130 = sbr.rel (%p128) target = $region28
      $region27: #{tpu_custom_call.1} parent=23 // pred_region
        %s131 = smul.u32 32, %s9
        %p132 = scmp.lt.s32.totalorder %s131, 63
        %s133 = scalar_select %p132, %s131, 63
        %s134 = smul.addr %s133, 4
        %s135 = scalar_lea.vmem %s0, %s134
        %s136 = smul.u32 32, %s9
      $region28: #{tpu_custom_call.1} parent=23 // pred_fallthru
        _
    $region24: #{tpu_custom_call.1} parent=5 // pred_fallthru
      _
    %p137 = scmp.le.s32.totalorder 1, %s9
    %p138 = scmp.lt.s32.totalorder %s9, 3
    %p139 = pnand %p137, %p138
    %p140 = pneg %p139
    // Predicated region
    $region29: #{tpu_custom_call.1} parent=5 // pred_check
      _
    $region30: #{tpu_custom_call.1} parent=5 // pred_check_branch
      %142 = sbr.rel (%p139) target = $region32
    $region31: #{tpu_custom_call.1} parent=5 // pred_region
      %s143 = ssub.s32 %s9, 1
      %s144 = smul.u32 32, %s14
      %p145 = scmp.lt.s32.totalorder %s144, 63
      %s146 = scalar_select %p145, %s144, 63
      %s147 = smul.addr %s146, 4
      %s148 = scalar_lea.vmem %s0, %s147
      %p149 = pneg %p35
      %p150 = pneg %p32
      %p151 = pneg %p56
      %p152 = pneg %p53
      %p153 = pneg %p77
      %p154 = pneg %p74
      %p155 = pneg %p103
      %p156 = pneg %p100
      %s157 = smul.u32 32, %s14
      %p158 = scmp.lt.s32.totalorder %s157, 63
      %s159 = scalar_select %p158, %s157, 63
      %s160 = smul.addr %s159, 4
      %s161 = scalar_lea.vmem %s3, %s160
      %s162 = smul.u32 32, %s14
      %p163 = scmp.lt.s32.totalorder %s162, 63
      %s164 = scalar_select %p163, %s162, 63
      %s165 = smul.addr %s164, 4
      %s166 = scalar_lea.vmem %s0, %s165
      %s167 = smul.u32 32, %s14
      %s168 = smul.u32 32, %s14
      %p169 = scmp.lt.s32.totalorder %s168, 63
      %s170 = scalar_select %p169, %s168, 63
      %s171 = smul.addr %s170, 4
      %s172 = scalar_lea.vmem %s3, %s171
      %s173 = smul.u32 32, %s14
      %v175 = vld [vmem:[%s166] sm:$0xf]
      %v176 = vld [vmem:[%s166 + $0x4] sm:$0xf]
      %v177 = vld [vmem:[%s166 + $0x8] sm:$0xf]
      %v178 = vld [vmem:[%s166 + $0xc] sm:$0xf]
      %v179 = vld [vmem:[%s166 + $0x10] sm:$0xf]
      %v180 = vld [vmem:[%s166 + $0x14] sm:$0xf]
      %v181 = vld [vmem:[%s166 + $0x18] sm:$0xf]
      %v182 = vld [vmem:[%s166 + $0x1c] sm:$0xf]
      %v183 = vld [vmem:[%s166 + $0x20] sm:$0xf]
      %v184 = vld [vmem:[%s166 + $0x24] sm:$0xf]
      %v185 = vld [vmem:[%s166 + $0x28] sm:$0xf]
      %v186 = vld [vmem:[%s166 + $0x2c] sm:$0xf]
      %v187 = vld [vmem:[%s166 + $0x30] sm:$0xf]
      %v188 = vld [vmem:[%s166 + $0x34] sm:$0xf]
      %v189 = vld [vmem:[%s166 + $0x38] sm:$0xf]
      %v190 = vld [vmem:[%s166 + $0x3c] sm:$0xf]
      %v191 = vld [vmem:[%s166 + $0x40] sm:$0xf]
      %v192 = vld [vmem:[%s166 + $0x44] sm:$0xf]
      %v193 = vld [vmem:[%s166 + $0x48] sm:$0xf]
      %v194 = vld [vmem:[%s166 + $0x4c] sm:$0xf]
      %v195 = vld [vmem:[%s166 + $0x50] sm:$0xf]
      %v196 = vld [vmem:[%s166 + $0x54] sm:$0xf]
      %v197 = vld [vmem:[%s166 + $0x58] sm:$0xf]
      %v198 = vld [vmem:[%s166 + $0x5c] sm:$0xf]
      %v199 = vld [vmem:[%s166 + $0x60] sm:$0xf]
      %v200 = vld [vmem:[%s166 + $0x64] sm:$0xf]
      %v201 = vld [vmem:[%s166 + $0x68] sm:$0xf]
      %v202 = vld [vmem:[%s166 + $0x6c] sm:$0xf]
      %v203 = vld [vmem:[%s166 + $0x70] sm:$0xf]
      %v204 = vld [vmem:[%s166 + $0x74] sm:$0xf]
      %v205 = vld [vmem:[%s166 + $0x78] sm:$0xf]
      %v206 = vld [vmem:[%s166 + $0x7c] sm:$0xf]
      %v207 = vld [vmem:[%s1] sm:$0xf]
      %v208 = vld [vmem:[%s1 + $0x4] sm:$0xf]
      %v209 = vld [vmem:[%s2] sm:$0x1]
      %v211 = vlaneseq
      %v212 = vshrl.u32 %v211, 7
      %v213 = vsub.s32 0, %v212
      %v214 = vrot.slane %v209, %v213
      %v248 = vunpack.c.l.b16 %v175
      %v249 = vunpack.c.l.b16 %v176
      %v250 = vunpack.c.l.b16 %v177
      %v251 = vunpack.c.l.b16 %v178
      %v252 = vunpack.c.l.b16 %v179
      %v253 = vunpack.c.l.b16 %v180
      %v254 = vunpack.c.l.b16 %v181
      %v255 = vunpack.c.l.b16 %v182
      %v256 = vunpack.c.l.b16 %v183
      %v257 = vunpack.c.l.b16 %v184
      %v258 = vunpack.c.l.b16 %v185
      %v259 = vunpack.c.l.b16 %v186
      %v260 = vunpack.c.l.b16 %v187
      %v261 = vunpack.c.l.b16 %v188
      %v262 = vunpack.c.l.b16 %v189
      %v263 = vunpack.c.l.b16 %v190
      %v264 = vunpack.c.l.b16 %v191
      %v265 = vunpack.c.l.b16 %v192
      %v266 = vunpack.c.l.b16 %v193
      %v267 = vunpack.c.l.b16 %v194
      %v268 = vunpack.c.l.b16 %v195
      %v269 = vunpack.c.l.b16 %v196
      %v270 = vunpack.c.l.b16 %v197
      %v271 = vunpack.c.l.b16 %v198
      %v272 = vunpack.c.l.b16 %v199
      %v273 = vunpack.c.l.b16 %v200
      %v274 = vunpack.c.l.b16 %v201
      %v275 = vunpack.c.l.b16 %v202
      %v276 = vunpack.c.l.b16 %v203
      %v277 = vunpack.c.l.b16 %v204
      %v278 = vunpack.c.l.b16 %v205
      %v279 = vunpack.c.l.b16 %v206
      %v280 = vpack.c.b16 %v249, %v248
      %v281 = vpack.c.b16 %v251, %v250
      %v282 = vpack.c.b16 %v253, %v252
      %v283 = vpack.c.b16 %v255, %v254
      %v284 = vpack.c.b16 %v257, %v256
      %v285 = vpack.c.b16 %v259, %v258
      %v286 = vpack.c.b16 %v261, %v260
      %v287 = vpack.c.b16 %v263, %v262
      %v288 = vpack.c.b16 %v265, %v264
      %v289 = vpack.c.b16 %v267, %v266
      %v290 = vpack.c.b16 %v269, %v268
      %v291 = vpack.c.b16 %v271, %v270
      %v292 = vpack.c.b16 %v273, %v272
      %v293 = vpack.c.b16 %v275, %v274
      %v294 = vpack.c.b16 %v277, %v276
      %v295 = vpack.c.b16 %v279, %v278
      %v298 = vunpack.c.l.b16 %v207
      %v299 = vunpack.c.l.b16 %v208
      %v300 = vpack.c.b16 %v299, %v298
      %vm302 = vcmask 130048
      %v304 = vsel %vm302, %v280, 0
      %v307 = vsel %vm302, %v281, 0
      %v310 = vsel %vm302, %v282, 0
      %v313 = vsel %vm302, %v283, 0
      %v316 = vsel %vm302, %v284, 0
      %v319 = vsel %vm302, %v285, 0
      %v322 = vsel %vm302, %v286, 0
      %v325 = vsel %vm302, %v287, 0
      %v328 = vsel %vm302, %v288, 0
      %v331 = vsel %vm302, %v289, 0
      %v334 = vsel %vm302, %v290, 0
      %v337 = vsel %vm302, %v291, 0
      %v340 = vsel %vm302, %v292, 0
      %v343 = vsel %vm302, %v293, 0
      %v346 = vsel %vm302, %v294, 0
      %v349 = vsel %vm302, %v295, 0
      %351 = vmatprep.subr.bf16.mxu0 0
      %352 = vmatpush1.bf16.msra.mxu0 %v300
      %353 = vmatprep.subr.bf16.mxu0 0
      %354 = vmatpush1.bf16.msra.mxu0 0
      %355 = vmatprep.subr.bf16.mxu0 0
      %356 = vmatpush1.bf16.msra.mxu0 0
      %357 = vmatprep.subr.bf16.mxu0 0
      %358 = vmatpush1.bf16.msra.mxu0 0
      %359 = vmatprep.subr.bf16.mxu0 0
      %360 = vmatpush1.bf16.msra.mxu0 0
      %361 = vmatprep.subr.bf16.mxu0 0
      %362 = vmatpush1.bf16.msra.mxu0 0
      %363 = vmatprep.subr.bf16.mxu0 0
      %364 = vmatpush1.bf16.msra.mxu0 0
      %365 = vmatprep.subr.bf16.mxu0 0
      %366 = vmatpush1.bf16.msra.mxu0 0
      %367 = vmatprep.subr.bf16.mxu0 0
      %368 = vmatpush1.bf16.msra.mxu0 0
      %369 = vmatprep.subr.bf16.mxu0 0
      %370 = vmatpush1.bf16.msra.mxu0 0
      %371 = vmatprep.subr.bf16.mxu0 0
      %372 = vmatpush1.bf16.msra.mxu0 0
      %373 = vmatprep.subr.bf16.mxu0 0
      %374 = vmatpush1.bf16.msra.mxu0 0
      %375 = vmatprep.subr.bf16.mxu0 0
      %376 = vmatpush1.bf16.msra.mxu0 0
      %377 = vmatprep.subr.bf16.mxu0 0
      %378 = vmatpush1.bf16.msra.mxu0 0
      %379 = vmatprep.subr.bf16.mxu0 0
      %380 = vmatpush1.bf16.msra.mxu0 0
      %381 = vmatprep.subr.bf16.mxu0 0
      %382 = vmatpush1.bf16.msra.mxu0 0
      %383 = vmatprep.mubr.bf16.mxu0 0
      %384 = vmatmul.mubr.bf16.gmra.mrb[0].mxu0 %v304
      %v385 = vpop.f32.mrb[0].mxu0
      %v386 = vadd.f32 %v214, %v385
      %v387 = vpop.f32.mrb[0].mxu0
      %v388 = vpop.f32.mrb[0].mxu0
      %v389 = vadd.f32 %v214, %v388
      %v390 = vpop.f32.mrb[0].mxu0
      %391 = vmatprep.mubr.bf16.mxu0 0
      %392 = vmatmul.mubr.bf16.gmra.mrb[0].mxu0 %v307
      %v393 = vpop.f32.mrb[0].mxu0
      %v394 = vadd.f32 %v214, %v393
      %v395 = vpop.f32.mrb[0].mxu0
      %v396 = vpop.f32.mrb[0].mxu0
      %v397 = vadd.f32 %v214, %v396
      %v398 = vpop.f32.mrb[0].mxu0
      %399 = vmatprep.mubr.bf16.mxu0 0
      %400 = vmatmul.mubr.bf16.gmra.mrb[0].mxu0 %v310
      %v401 = vpop.f32.mrb[0].mxu0
      %v402 = vadd.f32 %v214, %v401
      %v403 = vpop.f32.mrb[0].mxu0
      %v404 = vpop.f32.mrb[0].mxu0
      %v405 = vadd.f32 %v214, %v404
      %v406 = vpop.f32.mrb[0].mxu0
      %407 = vmatprep.mubr.bf16.mxu0 0
      %408 = vmatmul.mubr.bf16.gmra.mrb[0].mxu0 %v313
      %v409 = vpop.f32.mrb[0].mxu0
      %v410 = vadd.f32 %v214, %v409
      %v411 = vpop.f32.mrb[0].mxu0
      %v412 = vpop.f32.mrb[0].mxu0
      %v413 = vadd.f32 %v214, %v412
      %v414 = vpop.f32.mrb[0].mxu0
      %415 = vmatprep.mubr.bf16.mxu0 0
      %416 = vmatmul.mubr.bf16.gmra.mrb[0].mxu0 %v316
      %v417 = vpop.f32.mrb[0].mxu0
      %v418 = vadd.f32 %v214, %v417
      %v419 = vpop.f32.mrb[0].mxu0
      %v420 = vpop.f32.mrb[0].mxu0
      %v421 = vadd.f32 %v214, %v420
      %v422 = vpop.f32.mrb[0].mxu0
      %423 = vmatprep.mubr.bf16.mxu0 0
      %424 = vmatmul.mubr.bf16.gmra.mrb[0].mxu0 %v319
      %v425 = vpop.f32.mrb[0].mxu0
      %v426 = vadd.f32 %v214, %v425
      %v427 = vpop.f32.mrb[0].mxu0
      %v428 = vpop.f32.mrb[0].mxu0
      %v429 = vadd.f32 %v214, %v428
      %v430 = vpop.f32.mrb[0].mxu0
      %431 = vmatprep.mubr.bf16.mxu0 0
      %432 = vmatmul.mubr.bf16.gmra.mrb[0].mxu0 %v322
      %v433 = vpop.f32.mrb[0].mxu0
      %v434 = vadd.f32 %v214, %v433
      %v435 = vpop.f32.mrb[0].mxu0
      %v436 = vpop.f32.mrb[0].mxu0
      %v437 = vadd.f32 %v214, %v436
      %v438 = vpop.f32.mrb[0].mxu0
      %439 = vmatprep.mubr.bf16.mxu0 0
      %440 = vmatmul.mubr.bf16.gmra.mrb[0].mxu0 %v325
      %v441 = vpop.f32.mrb[0].mxu0
      %v442 = vadd.f32 %v214, %v441
      %v443 = vpop.f32.mrb[0].mxu0
      %v444 = vpop.f32.mrb[0].mxu0
      %v445 = vadd.f32 %v214, %v444
      %v446 = vpop.f32.mrb[0].mxu0
      %447 = vmatprep.mubr.bf16.mxu0 0
      %448 = vmatmul.mubr.bf16.gmra.mrb[0].mxu0 %v328
      %v449 = vpop.f32.mrb[0].mxu0
      %v450 = vadd.f32 %v214, %v449
      %v451 = vpop.f32.mrb[0].mxu0
      %v452 = vpop.f32.mrb[0].mxu0
      %v453 = vadd.f32 %v214, %v452
      %v454 = vpop.f32.mrb[0].mxu0
      %455 = vmatprep.mubr.bf16.mxu0 0
      %456 = vmatmul.mubr.bf16.gmra.mrb[0].mxu0 %v331
      %v457 = vpop.f32.mrb[0].mxu0
      %v458 = vadd.f32 %v214, %v457
      %v459 = vpop.f32.mrb[0].mxu0
      %v460 = vpop.f32.mrb[0].mxu0
      %v461 = vadd.f32 %v214, %v460
      %v462 = vpop.f32.mrb[0].mxu0
      %463 = vmatprep.mubr.bf16.mxu0 0
      %464 = vmatmul.mubr.bf16.gmra.mrb[0].mxu0 %v334
      %v465 = vpop.f32.mrb[0].mxu0
      %v466 = vadd.f32 %v214, %v465
      %v467 = vpop.f32.mrb[0].mxu0
      %v468 = vpop.f32.mrb[0].mxu0
      %v469 = vadd.f32 %v214, %v468
      %v470 = vpop.f32.mrb[0].mxu0
      %471 = vmatprep.mubr.bf16.mxu0 0
      %472 = vmatmul.mubr.bf16.gmra.mrb[0].mxu0 %v337
      %v473 = vpop.f32.mrb[0].mxu0
      %v474 = vadd.f32 %v214, %v473
      %v475 = vpop.f32.mrb[0].mxu0
      %v476 = vpop.f32.mrb[0].mxu0
      %v477 = vadd.f32 %v214, %v476
      %v478 = vpop.f32.mrb[0].mxu0
      %479 = vmatprep.mubr.bf16.mxu0 0
      %480 = vmatmul.mubr.bf16.gmra.mrb[0].mxu0 %v340
      %v481 = vpop.f32.mrb[0].mxu0
      %v482 = vadd.f32 %v214, %v481
      %v483 = vpop.f32.mrb[0].mxu0
      %v484 = vpop.f32.mrb[0].mxu0
      %v485 = vadd.f32 %v214, %v484
      %v486 = vpop.f32.mrb[0].mxu0
      %487 = vmatprep.mubr.bf16.mxu0 0
      %488 = vmatmul.mubr.bf16.gmra.mrb[0].mxu0 %v343
      %v489 = vpop.f32.mrb[0].mxu0
      %v490 = vadd.f32 %v214, %v489
      %v491 = vpop.f32.mrb[0].mxu0
      %v492 = vpop.f32.mrb[0].mxu0
      %v493 = vadd.f32 %v214, %v492
      %v494 = vpop.f32.mrb[0].mxu0
      %495 = vmatprep.mubr.bf16.mxu0 0
      %496 = vmatmul.mubr.bf16.gmra.mrb[0].mxu0 %v346
      %v497 = vpop.f32.mrb[0].mxu0
      %v498 = vadd.f32 %v214, %v497
      %v499 = vpop.f32.mrb[0].mxu0
      %v500 = vpop.f32.mrb[0].mxu0
      %v501 = vadd.f32 %v214, %v500
      %v502 = vpop.f32.mrb[0].mxu0
      %503 = vmatprep.mubr.bf16.mxu0 0
      %504 = vmatmul.mubr.bf16.gmra.mrb[0].mxu0 %v349
      %v505 = vpop.f32.mrb[0].mxu0
      %v506 = vadd.f32 %v214, %v505
      %v507 = vpop.f32.mrb[0].mxu0
      %v508 = vpop.f32.mrb[0].mxu0
      %v509 = vadd.f32 %v214, %v508
      %v510 = vpop.f32.mrb[0].mxu0
      %511 = vdwg.mxu0
      %v512 = vmax.f32 %v386, 0.0
      %v513 = vmax.f32 %v389, 0.0
      %v514 = vmax.f32 %v394, 0.0
      %v515 = vmax.f32 %v397, 0.0
      %v516 = vmax.f32 %v402, 0.0
      %v517 = vmax.f32 %v405, 0.0
      %v518 = vmax.f32 %v410, 0.0
      %v519 = vmax.f32 %v413, 0.0
      %v520 = vmax.f32 %v418, 0.0
      %v521 = vmax.f32 %v421, 0.0
      %v522 = vmax.f32 %v426, 0.0
      %v523 = vmax.f32 %v429, 0.0
      %v524 = vmax.f32 %v434, 0.0
      %v525 = vmax.f32 %v437, 0.0
      %v526 = vmax.f32 %v442, 0.0
      %v527 = vmax.f32 %v445, 0.0
      %v528 = vmax.f32 %v450, 0.0
      %v529 = vmax.f32 %v453, 0.0
      %v530 = vmax.f32 %v458, 0.0
      %v531 = vmax.f32 %v461, 0.0
      %v532 = vmax.f32 %v466, 0.0
      %v533 = vmax.f32 %v469, 0.0
      %v534 = vmax.f32 %v474, 0.0
      %v535 = vmax.f32 %v477, 0.0
      %v536 = vmax.f32 %v482, 0.0
      %v537 = vmax.f32 %v485, 0.0
      %v538 = vmax.f32 %v490, 0.0
      %v539 = vmax.f32 %v493, 0.0
      %v540 = vmax.f32 %v498, 0.0
      %v541 = vmax.f32 %v501, 0.0
      %v542 = vmax.f32 %v506, 0.0
      %v543 = vmax.f32 %v509, 0.0
      %v544 = vpack.c.bf16 %v513, %v512
      %v545 = vpack.c.bf16 %v515, %v514
      %v546 = vpack.c.bf16 %v517, %v516
      %v547 = vpack.c.bf16 %v519, %v518
      %v548 = vpack.c.bf16 %v521, %v520
      %v549 = vpack.c.bf16 %v523, %v522
      %v550 = vpack.c.bf16 %v525, %v524
      %v551 = vpack.c.bf16 %v527, %v526
      %v552 = vpack.c.bf16 %v529, %v528
      %v553 = vpack.c.bf16 %v531, %v530
      %v554 = vpack.c.bf16 %v533, %v532
      %v555 = vpack.c.bf16 %v535, %v534
      %v556 = vpack.c.bf16 %v537, %v536
      %v557 = vpack.c.bf16 %v539, %v538
      %v558 = vpack.c.bf16 %v541, %v540
      %v559 = vpack.c.bf16 %v543, %v542
      %v576 = vunpack.c.l.b16 %v544
      %v577 = vunpack.c.h.b16 %v544
      %v578 = vunpack.c.l.b16 %v545
      %v579 = vunpack.c.h.b16 %v545
      %v580 = vunpack.c.l.b16 %v546
      %v581 = vunpack.c.h.b16 %v546
      %v582 = vunpack.c.l.b16 %v547
      %v583 = vunpack.c.h.b16 %v547
      %v584 = vunpack.c.l.b16 %v548
      %v585 = vunpack.c.h.b16 %v548
      %v586 = vunpack.c.l.b16 %v549
      %v587 = vunpack.c.h.b16 %v549
      %v588 = vunpack.c.l.b16 %v550
      %v589 = vunpack.c.h.b16 %v550
      %v590 = vunpack.c.l.b16 %v551
      %v591 = vunpack.c.h.b16 %v551
      %v592 = vunpack.c.l.b16 %v552
      %v593 = vunpack.c.h.b16 %v552
      %v594 = vunpack.c.l.b16 %v553
      %v595 = vunpack.c.h.b16 %v553
      %v596 = vunpack.c.l.b16 %v554
      %v597 = vunpack.c.h.b16 %v554
      %v598 = vunpack.c.l.b16 %v555
      %v599 = vunpack.c.h.b16 %v555
      %v600 = vunpack.c.l.b16 %v556
      %v601 = vunpack.c.h.b16 %v556
      %v602 = vunpack.c.l.b16 %v557
      %v603 = vunpack.c.h.b16 %v557
      %v604 = vunpack.c.l.b16 %v558
      %v605 = vunpack.c.h.b16 %v558
      %v606 = vunpack.c.l.b16 %v559
      %v607 = vunpack.c.h.b16 %v559
      %v608 = vpack.c.b16 %v576, %v576
      %v609 = vpack.c.b16 %v577, %v577
      %v610 = vpack.c.b16 %v578, %v578
      %v611 = vpack.c.b16 %v579, %v579
      %v612 = vpack.c.b16 %v580, %v580
      %v613 = vpack.c.b16 %v581, %v581
      %v614 = vpack.c.b16 %v582, %v582
      %v615 = vpack.c.b16 %v583, %v583
      %v616 = vpack.c.b16 %v584, %v584
      %v617 = vpack.c.b16 %v585, %v585
      %v618 = vpack.c.b16 %v586, %v586
      %v619 = vpack.c.b16 %v587, %v587
      %v620 = vpack.c.b16 %v588, %v588
      %v621 = vpack.c.b16 %v589, %v589
      %v622 = vpack.c.b16 %v590, %v590
      %v623 = vpack.c.b16 %v591, %v591
      %v624 = vpack.c.b16 %v592, %v592
      %v625 = vpack.c.b16 %v593, %v593
      %v626 = vpack.c.b16 %v594, %v594
      %v627 = vpack.c.b16 %v595, %v595
      %v628 = vpack.c.b16 %v596, %v596
      %v629 = vpack.c.b16 %v597, %v597
      %v630 = vpack.c.b16 %v598, %v598
      %v631 = vpack.c.b16 %v599, %v599
      %v632 = vpack.c.b16 %v600, %v600
      %v633 = vpack.c.b16 %v601, %v601
      %v634 = vpack.c.b16 %v602, %v602
      %v635 = vpack.c.b16 %v603, %v603
      %v636 = vpack.c.b16 %v604, %v604
      %v637 = vpack.c.b16 %v605, %v605
      %v638 = vpack.c.b16 %v606, %v606
      %v639 = vpack.c.b16 %v607, %v607
      %vm672 = vcmask 60416
      %673 = vst.msk [vmem:[%s172] sm:$0xf] %vm672, %v608
      %674 = vst.msk [vmem:[%s172 + $0x4] sm:$0xf] %vm672, %v609
      %675 = vst.msk [vmem:[%s172 + $0x8] sm:$0xf] %vm672, %v610
      %676 = vst.msk [vmem:[%s172 + $0xc] sm:$0xf] %vm672, %v611
      %677 = vst.msk [vmem:[%s172 + $0x10] sm:$0xf] %vm672, %v612
      %678 = vst.msk [vmem:[%s172 + $0x14] sm:$0xf] %vm672, %v613
      %679 = vst.msk [vmem:[%s172 + $0x18] sm:$0xf] %vm672, %v614
      %680 = vst.msk [vmem:[%s172 + $0x1c] sm:$0xf] %vm672, %v615
      %681 = vst.msk [vmem:[%s172 + $0x20] sm:$0xf] %vm672, %v616
      %682 = vst.msk [vmem:[%s172 + $0x24] sm:$0xf] %vm672, %v617
      %683 = vst.msk [vmem:[%s172 + $0x28] sm:$0xf] %vm672, %v618
      %684 = vst.msk [vmem:[%s172 + $0x2c] sm:$0xf] %vm672, %v619
      %685 = vst.msk [vmem:[%s172 + $0x30] sm:$0xf] %vm672, %v620
      %686 = vst.msk [vmem:[%s172 + $0x34] sm:$0xf] %vm672, %v621
      %687 = vst.msk [vmem:[%s172 + $0x38] sm:$0xf] %vm672, %v622
      %688 = vst.msk [vmem:[%s172 + $0x3c] sm:$0xf] %vm672, %v623
      %689 = vst.msk [vmem:[%s172 + $0x40] sm:$0xf] %vm672, %v624
      %690 = vst.msk [vmem:[%s172 + $0x44] sm:$0xf] %vm672, %v625
      %691 = vst.msk [vmem:[%s172 + $0x48] sm:$0xf] %vm672, %v626
      %692 = vst.msk [vmem:[%s172 + $0x4c] sm:$0xf] %vm672, %v627
      %693 = vst.msk [vmem:[%s172 + $0x50] sm:$0xf] %vm672, %v628
      %694 = vst.msk [vmem:[%s172 + $0x54] sm:$0xf] %vm672, %v629
      %695 = vst.msk [vmem:[%s172 + $0x58] sm:$0xf] %vm672, %v630
      %696 = vst.msk [vmem:[%s172 + $0x5c] sm:$0xf] %vm672, %v631
      %697 = vst.msk [vmem:[%s172 + $0x60] sm:$0xf] %vm672, %v632
      %698 = vst.msk [vmem:[%s172 + $0x64] sm:$0xf] %vm672, %v633
      %699 = vst.msk [vmem:[%s172 + $0x68] sm:$0xf] %vm672, %v634
      %700 = vst.msk [vmem:[%s172 + $0x6c] sm:$0xf] %vm672, %v635
      %701 = vst.msk [vmem:[%s172 + $0x70] sm:$0xf] %vm672, %v636
      %702 = vst.msk [vmem:[%s172 + $0x74] sm:$0xf] %vm672, %v637
      %703 = vst.msk [vmem:[%s172 + $0x78] sm:$0xf] %vm672, %v638
      %704 = vst.msk [vmem:[%s172 + $0x7c] sm:$0xf] %vm672, %v639
      %s705 = smul.u32 32, %s14
      %p706 = scmp.lt.s32.totalorder %s705, 63
      %s707 = scalar_select %p706, %s705, 63
      %s708 = smul.addr %s707, 4
      %s709 = scalar_lea.vmem %s3, %s708
      // Predicated region
      $region33: #{tpu_custom_call.1} parent=31 // pred_check
        %p710 = pneg %p100
      $region34: #{tpu_custom_call.1} parent=31 // pred_check_branch
        %712 = sbr.rel (%p710) target = $region36
      $region35: #{tpu_custom_call.1} parent=31 // pred_region
        %s713 = smul.u32 32, %s14
      $region36: #{tpu_custom_call.1} parent=31 // pred_fallthru
        _
    $region32: #{tpu_custom_call.1} parent=5 // pred_fallthru
      _
    %p714 = scmp.le.s32.totalorder 2, %s9
    // Predicated region
    $region37: #{tpu_custom_call.1} parent=5 // pred_check
      %p715 = pneg %p714
    $region38: #{tpu_custom_call.1} parent=5 // pred_check_branch
      %717 = sbr.rel (%p715) target = $region40
    $region39: #{tpu_custom_call.1} parent=5 // pred_region
      %s718 = ssub.s32 %s9, 2
      // Predicated region
      $region41: #{tpu_custom_call.1} parent=39 // pred_check
        %p719 = pneg %p106
      $region42: #{tpu_custom_call.1} parent=39 // pred_check_branch
        %721 = sbr.rel (%p719) target = $region44
      $region43: #{tpu_custom_call.1} parent=39 // pred_region
        %s722 = smul.u32 32, %s15
        %p723 = scmp.lt.s32.totalorder %s722, 63
        %s724 = scalar_select %p723, %s722, 63
        %s725 = smul.addr %s724, 4
        %s726 = scalar_lea.vmem %s3, %s725
      $region44: #{tpu_custom_call.1} parent=39 // pred_fallthru
        _
    $region40: #{tpu_custom_call.1} parent=5 // pred_fallthru
      _
  $region6: #{tpu_custom_call.1} parent=0 // loop_footer
    %s13 = sadd.s32 1, %s9
  $region7: #{tpu_custom_call.1} parent=0 // loop_footer_branch
    %8 = sbr.rel target = $region3
  $region8: #{tpu_custom_call.1} parent=0 // loop_exit
    _

</llo_original>
